<compile_context>
chip_gen: v5e
topology: v5e:2x2
jax: 0.10.0
libtpu: 0.0.40
codegen_flags: <defaults>
</compile_context>

<pallas_src>
import functools

import jax
import jax.numpy as jnp
from jax.experimental import pallas as pl
from jax.experimental.pallas import tpu as pltpu

_BN_EPS = 1e-5  # PyTorch BatchNorm1d default


def _bn_train(y, gamma, beta, *, eps, relu):
    """Training-mode BatchNorm1d over the batch axis + optional ReLU.

    y: (N, D) f32.  gamma/beta: (1, D).  Biased variance (PyTorch normalization).
    One-pass statistics: var = E[y^2] - mean^2 (single reduction sweep).
    """
    inv_n = 1.0 / y.shape[0]
    mean = jnp.sum(y, axis=0, keepdims=True) * inv_n
    mean_sq = jnp.sum(y * y, axis=0, keepdims=True) * inv_n
    var = mean_sq - mean * mean
    out = (y - mean) * jax.lax.rsqrt(var + eps)
    out = out * gamma.astype(jnp.float32) + beta.astype(jnp.float32)
    if relu:
        out = jnp.maximum(out, 0.0)
    return out


def _fused_mlp_kernel(x_ref, w1_ref, g1_ref, b1_ref,
                      w2_ref, g2_ref, b2_ref,
                      w3_ref, g3_ref, b3_ref,
                      o_ref, h2_ref, *, eps):
    """Fused 3-layer projection MLP.

    x_ref:  (N, Din)  bf16
    w*_ref: (in, out) bf16 (pre-transposed so y = x @ W)
    g*/b*:  (1, out)  f32  (BatchNorm affine)
    o_ref:  (N, tn)   f32  (one layer-3 feature tile per grid step)
    h2_ref: (N, H)    bf16 VMEM scratch -- layer-2 output, resident across grid
    """
    j = pl.program_id(0)

    # ---- Layers 1 & 2: computed once (full hidden width), kept in VMEM scratch.
    @pl.when(j == 0)
    def _():
        y1 = jnp.dot(x_ref[...], w1_ref[...], preferred_element_type=jnp.float32)
        h1 = _bn_train(y1, g1_ref[...], b1_ref[...], eps=eps, relu=True)
        y2 = jnp.dot(h1.astype(w2_ref.dtype), w2_ref[...],
                     preferred_element_type=jnp.float32)
        h2 = _bn_train(y2, g2_ref[...], b2_ref[...], eps=eps, relu=True)
        h2_ref[...] = h2.astype(h2_ref.dtype)

    # ---- Layer 3: one lane-dense (N, tn) output tile per grid step (no ReLU).
    y3 = jnp.dot(h2_ref[...], w3_ref[...], preferred_element_type=jnp.float32)
    out = _bn_train(y3, g3_ref[...], b3_ref[...], eps=eps, relu=False)
    o_ref[...] = out.astype(o_ref.dtype)


def _pick_out_tile(dout):
    """Lane-dense layer-3 feature tile: multiple of 128, as wide as divides Dout."""
    for tn in (512, 256, 128):
        if dout % tn == 0:
            return tn
    return dout  # small / irregular Dout: single full-width tile


def _vmem_limit_bytes(n, din, hidden, tn):
    """Conservative VMEM budget (everything double-buffered) with margin,
    clamped to 64 MiB so the same setting is legal on v7x (64 MiB physical)."""
    bf16, f32 = 2, 4
    resident = (n * din + din * hidden + hidden * hidden + n * hidden) * bf16 \
        + 4 * hidden * f32                              # x, W1, W2, h2 scratch, g/b 1&2
    per_tile = hidden * tn * bf16 + 2 * tn * f32 + n * tn * f32   # W3, g3, b3, out tile
    est = 2 * (resident + 2 * per_tile) + (4 << 20)
    return int(min(64 << 20, max(32 << 20, est)))


def projection_mlp_forward_pallas(params, x):
    w1, g1, b1 = params["layer1"]
    w2, g2, b2 = params["layer2"]
    w3, g3, b3 = params["layer3"]

    n, din = x.shape
    hidden = w1.shape[1]
    dout = w3.shape[1]
    tn = _pick_out_tile(dout)
    grid = (dout // tn,)

    # bf16 MXU operands; accumulation and BN statistics remain f32 in-kernel.
    x = x.astype(jnp.bfloat16)

    full = lambda shape: pl.BlockSpec(shape, lambda j: (0, 0))  # resident block
    tile = lambda shape: pl.BlockSpec(shape, lambda j: (0, j))  # Dout-tiled block

    kernel = functools.partial(_fused_mlp_kernel, eps=_BN_EPS)

    return pl.pallas_call(
        kernel,
        out_shape=jax.ShapeDtypeStruct((n, dout), jnp.float32),
        grid=grid,
        in_specs=[
            full((n, din)),                      # x
            full((din, hidden)),                 # W1 (pre-transposed)
            full((1, hidden)), full((1, hidden)),  # gamma1, beta1
            full((hidden, hidden)),              # W2
            full((1, hidden)), full((1, hidden)),  # gamma2, beta2
            tile((hidden, tn)),                  # W3 feature tile
            tile((1, tn)), tile((1, tn)),        # gamma3, beta3 tiles
        ],
        out_specs=tile((n, tn)),
        scratch_shapes=[pltpu.VMEM((n, hidden), jnp.bfloat16)],  # layer-2 activations
        compiler_params=pltpu.CompilerParams(
            # "arbitrary": step 0 fills the scratch that later steps consume.
            dimension_semantics=("arbitrary",),
            vmem_limit_bytes=_vmem_limit_bytes(n, din, hidden, tn),
        ),
    )(x, w1, g1, b1, w2, g2, b2, w3, g3, b3)


def _init_layer(key, in_dim, out_dim, dtype=jnp.bfloat16):
    """nn.Linear default init U(-1/sqrt(in), 1/sqrt(in)) for W (stored as W^T).

    The Linear bias is omitted: train-mode BatchNorm's mean subtraction cancels
    any per-feature constant, so the forward pass is mathematically unchanged.
    BatchNorm affine defaults: gamma=1, beta=0 (kept in f32).
    """
    bound = 1.0 / (in_dim ** 0.5)
    w = jax.random.uniform(key, (in_dim, out_dim), jnp.float32, -bound, bound)
    gamma = jnp.ones((1, out_dim), jnp.float32)
    beta = jnp.zeros((1, out_dim), jnp.float32)
    return w.astype(dtype), gamma, beta


def projection_mlp_init(key, in_dim, hidden_dim, out_dim, dtype=jnp.bfloat16):
    # layer3's BatchNorm1d(hidden_dim) only typechecks when out_dim == hidden_dim,
    # exactly as in the PyTorch module.
    assert out_dim == hidden_dim, \
        "layer3 BatchNorm1d(hidden_dim) requires out_dim == hidden_dim"
    k1, k2, k3 = jax.random.split(key, 3)
    return {
        "layer1": _init_layer(k1, in_dim, hidden_dim, dtype),
        "layer2": _init_layer(k2, hidden_dim, hidden_dim, dtype),
        "layer3": _init_layer(k3, hidden_dim, out_dim, dtype),
    }


if __name__ == "__main__":
    # Small shapes consistent with the module: x is (batch, in_dim) features.
    batch, in_dim, hidden_dim, out_dim = 8, 32, 128, 128

    key = jax.random.PRNGKey(0)
    kx, kp = jax.random.split(key)
    x = jax.random.normal(kx, (batch, in_dim), jnp.float32)

    params = projection_mlp_init(kp, in_dim, hidden_dim, out_dim)

    fwd = jax.jit(projection_mlp_forward_pallas)
    out = jax.block_until_ready(fwd(params, x))

    assert out.shape == (batch, out_dim), out.shape
    assert bool(jnp.isfinite(out).all()), "non-finite output"
    print("KERNEL_OK")
</pallas_src>

<mosaic_0001>
module attributes {stable_mosaic.version = 11 : i64} {
  func.func @_fused_mlp_kernel(%arg0: i32, %arg1: memref<8x32xbf16, #tpu.memory_space<vmem>>, %arg2: memref<32x128xbf16, #tpu.memory_space<vmem>>, %arg3: memref<1x128xf32, #tpu.memory_space<vmem>>, %arg4: memref<1x128xf32, #tpu.memory_space<vmem>>, %arg5: memref<128x128xbf16, #tpu.memory_space<vmem>>, %arg6: memref<1x128xf32, #tpu.memory_space<vmem>>, %arg7: memref<1x128xf32, #tpu.memory_space<vmem>>, %arg8: memref<128x128xbf16, #tpu.memory_space<vmem>>, %arg9: memref<1x128xf32, #tpu.memory_space<vmem>>, %arg10: memref<1x128xf32, #tpu.memory_space<vmem>>, %arg11: memref<8x128xf32, #tpu.memory_space<vmem>>, %arg12: memref<8x128xbf16, #tpu.memory_space<vmem>>) attributes {dimension_semantics = [#tpu.dimension_semantics<arbitrary>], iteration_bounds = array<i64: 1>, scalar_prefetch = 0 : i64, scratch_operands = 1 : i64, tpu.core_type = #tpu.core_type<tc>, window_params = [{pipeline_mode = #tpu.pipeline_mode<synchronous>, transform_indices = @transform_0, window_bounds = array<i64: 8, 32>}, {pipeline_mode = #tpu.pipeline_mode<synchronous>, transform_indices = @transform_1, window_bounds = array<i64: 32, 128>}, {pipeline_mode = #tpu.pipeline_mode<synchronous>, transform_indices = @transform_2, window_bounds = array<i64: 1, 128>}, {pipeline_mode = #tpu.pipeline_mode<synchronous>, transform_indices = @transform_3, window_bounds = array<i64: 1, 128>}, {pipeline_mode = #tpu.pipeline_mode<synchronous>, transform_indices = @transform_4, window_bounds = array<i64: 128, 128>}, {pipeline_mode = #tpu.pipeline_mode<synchronous>, transform_indices = @transform_5, window_bounds = array<i64: 1, 128>}, {pipeline_mode = #tpu.pipeline_mode<synchronous>, transform_indices = @transform_6, window_bounds = array<i64: 1, 128>}, {transform_indices = @transform_7, window_bounds = array<i64: 128, 128>}, {transform_indices = @transform_8, window_bounds = array<i64: 1, 128>}, {transform_indices = @transform_9, window_bounds = array<i64: 1, 128>}, {transform_indices = @transform_10, window_bounds = array<i64: 8, 128>}]} {
    %c0_i32 = arith.constant 0 : i32
    %0 = arith.cmpi eq, %arg0, %c0_i32 : i32
    %1 = arith.extui %0 : i1 to i32
    %c0_i32_0 = arith.constant 0 : i32
    %2 = arith.cmpi ne, %1, %c0_i32_0 : i32
    scf.if %2 {
      %c0_15 = arith.constant 0 : index
      %c0_16 = arith.constant 0 : index
      %31 = vector.load %arg1[%c0_15, %c0_16] : memref<8x32xbf16, #tpu.memory_space<vmem>>, vector<8x32xbf16>
      %c0_17 = arith.constant 0 : index
      %c0_18 = arith.constant 0 : index
      %32 = vector.load %arg2[%c0_17, %c0_18] : memref<32x128xbf16, #tpu.memory_space<vmem>>, vector<32x128xbf16>
      %cst_19 = arith.constant dense<0.000000e+00> : vector<8x128xf32>
      %33 = tpu.matmul %31, %32, %cst_19 {dimension_numbers = #tpu.dot_dimension_numbers<[1], [0], [0], [1], [0, 0, 1, 1], [], []>} : vector<8x32xbf16>, vector<32x128xbf16>, vector<8x128xf32> -> vector<8x128xf32>
      %c0_20 = arith.constant 0 : index
      %c0_21 = arith.constant 0 : index
      %34 = vector.load %arg3[%c0_20, %c0_21] : memref<1x128xf32, #tpu.memory_space<vmem>>, vector<1x128xf32>
      %c0_22 = arith.constant 0 : index
      %c0_23 = arith.constant 0 : index
      %35 = vector.load %arg4[%c0_22, %c0_23] : memref<1x128xf32, #tpu.memory_space<vmem>>, vector<1x128xf32>
      %cst_24 = arith.constant dense<0.000000e+00> : vector<128xf32>
      %36 = vector.multi_reduction <add>, %33, %cst_24 [0] : vector<8x128xf32> to vector<128xf32>
      %37 = vector.shape_cast %36 : vector<128xf32> to vector<1x128xf32>
      %cst_25 = arith.constant 1.250000e-01 : f32
      %38 = vector.broadcast %cst_25 : f32 to vector<1x128xf32>
      %39 = arith.mulf %37, %38 : vector<1x128xf32>
      %40 = arith.mulf %33, %33 : vector<8x128xf32>
      %cst_26 = arith.constant dense<0.000000e+00> : vector<128xf32>
      %41 = vector.multi_reduction <add>, %40, %cst_26 [0] : vector<8x128xf32> to vector<128xf32>
      %42 = vector.shape_cast %41 : vector<128xf32> to vector<1x128xf32>
      %cst_27 = arith.constant 1.250000e-01 : f32
      %43 = vector.broadcast %cst_27 : f32 to vector<1x128xf32>
      %44 = arith.mulf %42, %43 : vector<1x128xf32>
      %45 = arith.mulf %39, %39 : vector<1x128xf32>
      %46 = arith.subf %44, %45 : vector<1x128xf32>
      %47 = vector.broadcast %39 : vector<1x128xf32> to vector<8x128xf32>
      %48 = arith.subf %33, %47 : vector<8x128xf32>
      %cst_28 = arith.constant 9.99999974E-6 : f32
      %49 = vector.broadcast %cst_28 : f32 to vector<1x128xf32>
      %50 = arith.addf %46, %49 : vector<1x128xf32>
      %51 = math.rsqrt %50 : vector<1x128xf32>
      %52 = vector.broadcast %51 : vector<1x128xf32> to vector<8x128xf32>
      %53 = arith.mulf %48, %52 : vector<8x128xf32>
      %54 = vector.broadcast %34 : vector<1x128xf32> to vector<8x128xf32>
      %55 = arith.mulf %53, %54 : vector<8x128xf32>
      %56 = vector.broadcast %35 : vector<1x128xf32> to vector<8x128xf32>
      %57 = arith.addf %55, %56 : vector<8x128xf32>
      %cst_29 = arith.constant 0.000000e+00 : f32
      %58 = vector.broadcast %cst_29 : f32 to vector<8x128xf32>
      %59 = arith.maximumf %57, %58 : vector<8x128xf32>
      %60 = arith.truncf %59 : vector<8x128xf32> to vector<8x128xbf16>
      %c0_30 = arith.constant 0 : index
      %c0_31 = arith.constant 0 : index
      %61 = vector.load %arg5[%c0_30, %c0_31] : memref<128x128xbf16, #tpu.memory_space<vmem>>, vector<128x128xbf16>
      %cst_32 = arith.constant dense<0.000000e+00> : vector<8x128xf32>
      %62 = tpu.matmul %60, %61, %cst_32 {dimension_numbers = #tpu.dot_dimension_numbers<[1], [0], [0], [1], [0, 0, 1, 1], [], []>} : vector<8x128xbf16>, vector<128x128xbf16>, vector<8x128xf32> -> vector<8x128xf32>
      %c0_33 = arith.constant 0 : index
      %c0_34 = arith.constant 0 : index
      %63 = vector.load %arg6[%c0_33, %c0_34] : memref<1x128xf32, #tpu.memory_space<vmem>>, vector<1x128xf32>
      %c0_35 = arith.constant 0 : index
      %c0_36 = arith.constant 0 : index
      %64 = vector.load %arg7[%c0_35, %c0_36] : memref<1x128xf32, #tpu.memory_space<vmem>>, vector<1x128xf32>
      %cst_37 = arith.constant dense<0.000000e+00> : vector<128xf32>
      %65 = vector.multi_reduction <add>, %62, %cst_37 [0] : vector<8x128xf32> to vector<128xf32>
      %66 = vector.shape_cast %65 : vector<128xf32> to vector<1x128xf32>
      %cst_38 = arith.constant 1.250000e-01 : f32
      %67 = vector.broadcast %cst_38 : f32 to vector<1x128xf32>
      %68 = arith.mulf %66, %67 : vector<1x128xf32>
      %69 = arith.mulf %62, %62 : vector<8x128xf32>
      %cst_39 = arith.constant dense<0.000000e+00> : vector<128xf32>
      %70 = vector.multi_reduction <add>, %69, %cst_39 [0] : vector<8x128xf32> to vector<128xf32>
      %71 = vector.shape_cast %70 : vector<128xf32> to vector<1x128xf32>
      %cst_40 = arith.constant 1.250000e-01 : f32
      %72 = vector.broadcast %cst_40 : f32 to vector<1x128xf32>
      %73 = arith.mulf %71, %72 : vector<1x128xf32>
      %74 = arith.mulf %68, %68 : vector<1x128xf32>
      %75 = arith.subf %73, %74 : vector<1x128xf32>
      %76 = vector.broadcast %68 : vector<1x128xf32> to vector<8x128xf32>
      %77 = arith.subf %62, %76 : vector<8x128xf32>
      %cst_41 = arith.constant 9.99999974E-6 : f32
      %78 = vector.broadcast %cst_41 : f32 to vector<1x128xf32>
      %79 = arith.addf %75, %78 : vector<1x128xf32>
      %80 = math.rsqrt %79 : vector<1x128xf32>
      %81 = vector.broadcast %80 : vector<1x128xf32> to vector<8x128xf32>
      %82 = arith.mulf %77, %81 : vector<8x128xf32>
      %83 = vector.broadcast %63 : vector<1x128xf32> to vector<8x128xf32>
      %84 = arith.mulf %82, %83 : vector<8x128xf32>
      %85 = vector.broadcast %64 : vector<1x128xf32> to vector<8x128xf32>
      %86 = arith.addf %84, %85 : vector<8x128xf32>
      %cst_42 = arith.constant 0.000000e+00 : f32
      %87 = vector.broadcast %cst_42 : f32 to vector<8x128xf32>
      %88 = arith.maximumf %86, %87 : vector<8x128xf32>
      %89 = arith.truncf %88 : vector<8x128xf32> to vector<8x128xbf16>
      %c0_43 = arith.constant 0 : index
      %c0_44 = arith.constant 0 : index
      %90 = vector.load %arg12[%c0_43, %c0_44] : memref<8x128xbf16, #tpu.memory_space<vmem>>, vector<8x128xbf16>
      tpu.vector_store %arg12[%c0_43, %c0_44], %89 {strides = array<i32>} : memref<8x128xbf16, #tpu.memory_space<vmem>>, vector<8x128xbf16>,
    } else {
    }
    %c0 = arith.constant 0 : index
    %c0_1 = arith.constant 0 : index
    %3 = vector.load %arg12[%c0, %c0_1] : memref<8x128xbf16, #tpu.memory_space<vmem>>, vector<8x128xbf16>
    %c0_2 = arith.constant 0 : index
    %c0_3 = arith.constant 0 : index
    %4 = vector.load %arg8[%c0_2, %c0_3] : memref<128x128xbf16, #tpu.memory_space<vmem>>, vector<128x128xbf16>
    %cst = arith.constant dense<0.000000e+00> : vector<8x128xf32>
    %5 = tpu.matmul %3, %4, %cst {dimension_numbers = #tpu.dot_dimension_numbers<[1], [0], [0], [1], [0, 0, 1, 1], [], []>} : vector<8x128xbf16>, vector<128x128xbf16>, vector<8x128xf32> -> vector<8x128xf32>
    %c0_4 = arith.constant 0 : index
    %c0_5 = arith.constant 0 : index
    %6 = vector.load %arg9[%c0_4, %c0_5] : memref<1x128xf32, #tpu.memory_space<vmem>>, vector<1x128xf32>
    %c0_6 = arith.constant 0 : index
    %c0_7 = arith.constant 0 : index
    %7 = vector.load %arg10[%c0_6, %c0_7] : memref<1x128xf32, #tpu.memory_space<vmem>>, vector<1x128xf32>
    %cst_8 = arith.constant dense<0.000000e+00> : vector<128xf32>
    %8 = vector.multi_reduction <add>, %5, %cst_8 [0] : vector<8x128xf32> to vector<128xf32>
    %9 = vector.shape_cast %8 : vector<128xf32> to vector<1x128xf32>
    %cst_9 = arith.constant 1.250000e-01 : f32
    %10 = vector.broadcast %cst_9 : f32 to vector<1x128xf32>
    %11 = arith.mulf %9, %10 : vector<1x128xf32>
    %12 = arith.mulf %5, %5 : vector<8x128xf32>
    %cst_10 = arith.constant dense<0.000000e+00> : vector<128xf32>
    %13 = vector.multi_reduction <add>, %12, %cst_10 [0] : vector<8x128xf32> to vector<128xf32>
    %14 = vector.shape_cast %13 : vector<128xf32> to vector<1x128xf32>
    %cst_11 = arith.constant 1.250000e-01 : f32
    %15 = vector.broadcast %cst_11 : f32 to vector<1x128xf32>
    %16 = arith.mulf %14, %15 : vector<1x128xf32>
    %17 = arith.mulf %11, %11 : vector<1x128xf32>
    %18 = arith.subf %16, %17 : vector<1x128xf32>
    %19 = vector.broadcast %11 : vector<1x128xf32> to vector<8x128xf32>
    %20 = arith.subf %5, %19 : vector<8x128xf32>
    %cst_12 = arith.constant 9.99999974E-6 : f32
    %21 = vector.broadcast %cst_12 : f32 to vector<1x128xf32>
    %22 = arith.addf %18, %21 : vector<1x128xf32>
    %23 = math.rsqrt %22 : vector<1x128xf32>
    %24 = vector.broadcast %23 : vector<1x128xf32> to vector<8x128xf32>
    %25 = arith.mulf %20, %24 : vector<8x128xf32>
    %26 = vector.broadcast %6 : vector<1x128xf32> to vector<8x128xf32>
    %27 = arith.mulf %25, %26 : vector<8x128xf32>
    %28 = vector.broadcast %7 : vector<1x128xf32> to vector<8x128xf32>
    %29 = arith.addf %27, %28 : vector<8x128xf32>
    %c0_13 = arith.constant 0 : index
    %c0_14 = arith.constant 0 : index
    %30 = vector.load %arg11[%c0_13, %c0_14] : memref<8x128xf32, #tpu.memory_space<vmem>>, vector<8x128xf32>
    tpu.vector_store %arg11[%c0_13, %c0_14], %29 {strides = array<i32>} : memref<8x128xf32, #tpu.memory_space<vmem>>, vector<8x128xf32>,
    return
  }
  func.func @transform_0(%arg0: i32) -> (i32, i32) {
    %c0_i32 = arith.constant 0 : i32
    %c0_i32_0 = arith.constant 0 : i32
    %c0_i32_1 = arith.constant 0 : i32
    return %c0_i32, %c0_i32_0 : i32, i32
  }
  func.func @transform_1(%arg0: i32) -> (i32, i32) {
    %c0_i32 = arith.constant 0 : i32
    %c0_i32_0 = arith.constant 0 : i32
    %c0_i32_1 = arith.constant 0 : i32
    return %c0_i32, %c0_i32_0 : i32, i32
  }
  func.func @transform_2(%arg0: i32) -> (i32, i32) {
    %c0_i32 = arith.constant 0 : i32
    %c0_i32_0 = arith.constant 0 : i32
    %c0_i32_1 = arith.constant 0 : i32
    return %c0_i32, %c0_i32_0 : i32, i32
  }
  func.func @transform_3(%arg0: i32) -> (i32, i32) {
    %c0_i32 = arith.constant 0 : i32
    %c0_i32_0 = arith.constant 0 : i32
    %c0_i32_1 = arith.constant 0 : i32
    return %c0_i32, %c0_i32_0 : i32, i32
  }
  func.func @transform_4(%arg0: i32) -> (i32, i32) {
    %c0_i32 = arith.constant 0 : i32
    %c0_i32_0 = arith.constant 0 : i32
    %c0_i32_1 = arith.constant 0 : i32
    return %c0_i32, %c0_i32_0 : i32, i32
  }
  func.func @transform_5(%arg0: i32) -> (i32, i32) {
    %c0_i32 = arith.constant 0 : i32
    %c0_i32_0 = arith.constant 0 : i32
    %c0_i32_1 = arith.constant 0 : i32
    return %c0_i32, %c0_i32_0 : i32, i32
  }
  func.func @transform_6(%arg0: i32) -> (i32, i32) {
    %c0_i32 = arith.constant 0 : i32
    %c0_i32_0 = arith.constant 0 : i32
    %c0_i32_1 = arith.constant 0 : i32
    return %c0_i32, %c0_i32_0 : i32, i32
  }
  func.func @transform_7(%arg0: i32) -> (i32, i32) {
    %c0_i32 = arith.constant 0 : i32
    %c0_i32_0 = arith.constant 0 : i32
    return %c0_i32, %arg0 : i32, i32
  }
  func.func @transform_8(%arg0: i32) -> (i32, i32) {
    %c0_i32 = arith.constant 0 : i32
    %c0_i32_0 = arith.constant 0 : i32
    return %c0_i32, %arg0 : i32, i32
  }
  func.func @transform_9(%arg0: i32) -> (i32, i32) {
    %c0_i32 = arith.constant 0 : i32
    %c0_i32_0 = arith.constant 0 : i32
    return %c0_i32, %arg0 : i32, i32
  }
  func.func @transform_10(%arg0: i32) -> (i32, i32) {
    %c0_i32 = arith.constant 0 : i32
    %c0_i32_0 = arith.constant 0 : i32
    return %c0_i32, %arg0 : i32, i32
  }
}

</mosaic_0001>

<llo_original>
// kernel: projection_mlp_forward_pallas.1
$region0: #{projection_mlp_forward_pallas.1}
  #allocation0 [shape = 'u32[]', space=smem, size = 0x4, offset = 0x4, fixed_abs, tag = 'smem constant byte address 0x4 - core index']
  #allocation1 [shape = 'u32[72,128]{1,0:T(1,128)}', space=vmem, size = 0x9000, scoped, tag = 'internal scratch']
  #allocation2 [shape = 'bf16[8,128]{1,0:T(8,128)(2,1)}', space=vmem, size = 0x800, scoped, tag = 'scratch operand']
  %s0 = inlined_call_operand.vmem [shape: bf16[8,32], index: 0, kind: input, shape index: {}]
  %s1 = inlined_call_operand.hbm [shape: bf16[32,128], index: 1, kind: input, shape index: {}]
  %s2 = inlined_call_operand.vmem [shape: f32[1,128], index: 2, kind: input, shape index: {}]
  %s3 = inlined_call_operand.vmem [shape: f32[1,128], index: 3, kind: input, shape index: {}]
  %s4 = inlined_call_operand.hbm [shape: bf16[128,128], index: 4, kind: input, shape index: {}]
  %s5 = inlined_call_operand.vmem [shape: f32[1,128], index: 5, kind: input, shape index: {}]
  %s6 = inlined_call_operand.vmem [shape: f32[1,128], index: 6, kind: input, shape index: {}]
  %s7 = inlined_call_operand.hbm [shape: bf16[128,128], index: 7, kind: input, shape index: {}]
  %s8 = inlined_call_operand.vmem [shape: f32[1,128], index: 8, kind: input, shape index: {}]
  %s9 = inlined_call_operand.vmem [shape: f32[1,128], index: 9, kind: input, shape index: {}]
  %s10 = inlined_call_operand.hbm [shape: f32[8,128], index: 10, kind: output, shape index: {}]
  %s11 = sld [smem:[#allocation0]]
  $region66: #{projection_mlp_forward_pallas.1} parent=0
    _
  %s13 = ssub.s32 1, %s11
  %s14 = scalar_select 0, %s13, %s11
  $region1: #{projection_mlp_forward_pallas.1} parent=0
    #allocation3 [shape = 'u8[8192]{0}', space=vmem, size = 0x2000, scoped, tag = 'input window, operand 1, single buffered']
    #allocation4 [shape = 's32[1]{0}', space=sflag, size = 0x4, scoped, tag = 'scoped memory for projection_mlp_forward_pallas.1']
    #allocation5 [shape = 's32[1]{0}', space=sflag, size = 0x4, scoped, tag = 'scoped memory for projection_mlp_forward_pallas.1']
    #allocation6 [shape = 'u8[32768]{0}', space=vmem, size = 0x8000, scoped, tag = 'input window, operand 4, single buffered']
    #allocation7 [shape = 's32[1]{0}', space=sflag, size = 0x4, scoped, tag = 'scoped memory for projection_mlp_forward_pallas.1']
    #allocation8 [shape = 'u8[32768]{0}', space=vmem, size = 0x8000, scoped, tag = 'input window, operand 7, single buffered']
    #allocation9 [shape = 'u8[4096]{0}', space=vmem, size = 0x1000, scoped, tag = 'output window, operand 0, single buffered']
    %15 = vsyncpa [#allocation4], 0
    %16 = vsyncpa [#allocation7], 0
    %17 = vsyncpa [#allocation5], 0
    // Predicated region
    $region2: #{projection_mlp_forward_pallas.1} parent=1 // pred_check
      _
    $region3: #{projection_mlp_forward_pallas.1} parent=1 // pred_check_branch
      %19 = sbr.rel (0) target = $region5
    $region4: #{projection_mlp_forward_pallas.1} parent=1 // pred_region
      _
    $region5: #{projection_mlp_forward_pallas.1} parent=1 // pred_fallthru
      _
    // Predicated region
    $region6: #{projection_mlp_forward_pallas.1} parent=1 // pred_check
      _
    $region7: #{projection_mlp_forward_pallas.1} parent=1 // pred_check_branch
      %21 = sbr.rel (0) target = $region9
    $region8: #{projection_mlp_forward_pallas.1} parent=1 // pred_region
      %23 = vsyncadd [#allocation4], 0
      %s24 = sshll.u32 %s1, 4
      %s25 = int_to_ptr.hbm [resolvable:$true] %s24
      %s26 = sshll.u32 [#allocation3], 4
      %s27 = int_to_ptr.vmem [resolvable:$true] %s26
      %32 = dma.hbm_to_vmem [thread:$0]  %s25, 256, %s27, [#allocation4], 64, 64, 4
    $region9: #{projection_mlp_forward_pallas.1} parent=1 // pred_fallthru
      _
    // Predicated region
    $region10: #{projection_mlp_forward_pallas.1} parent=1 // pred_check
      _
    $region11: #{projection_mlp_forward_pallas.1} parent=1 // pred_check_branch
      %34 = sbr.rel (0) target = $region13
    $region12: #{projection_mlp_forward_pallas.1} parent=1 // pred_region
      _
    $region13: #{projection_mlp_forward_pallas.1} parent=1 // pred_fallthru
      _
    // Predicated region
    $region14: #{projection_mlp_forward_pallas.1} parent=1 // pred_check
      _
    $region15: #{projection_mlp_forward_pallas.1} parent=1 // pred_check_branch
      %36 = sbr.rel (0) target = $region17
    $region16: #{projection_mlp_forward_pallas.1} parent=1 // pred_region
      _
    $region17: #{projection_mlp_forward_pallas.1} parent=1 // pred_fallthru
      _
    // Predicated region
    $region18: #{projection_mlp_forward_pallas.1} parent=1 // pred_check
      _
    $region19: #{projection_mlp_forward_pallas.1} parent=1 // pred_check_branch
      %38 = sbr.rel (0) target = $region21
    $region20: #{projection_mlp_forward_pallas.1} parent=1 // pred_region
      %40 = vsyncadd [#allocation7], 0
      %s41 = sshll.u32 %s4, 4
      %s42 = int_to_ptr.hbm [resolvable:$true] %s41
      %s43 = sshll.u32 [#allocation6], 4
      %s44 = int_to_ptr.vmem [resolvable:$true] %s43
      %49 = dma.hbm_to_vmem [thread:$0]  %s42, 1024, %s44, [#allocation7], 64, 64, 4
    $region21: #{projection_mlp_forward_pallas.1} parent=1 // pred_fallthru
      _
    // Predicated region
    $region22: #{projection_mlp_forward_pallas.1} parent=1 // pred_check
      _
    $region23: #{projection_mlp_forward_pallas.1} parent=1 // pred_check_branch
      %51 = sbr.rel (0) target = $region25
    $region24: #{projection_mlp_forward_pallas.1} parent=1 // pred_region
      _
    $region25: #{projection_mlp_forward_pallas.1} parent=1 // pred_fallthru
      _
    // Predicated region
    $region26: #{projection_mlp_forward_pallas.1} parent=1 // pred_check
      _
    $region27: #{projection_mlp_forward_pallas.1} parent=1 // pred_check_branch
      %53 = sbr.rel (0) target = $region29
    $region28: #{projection_mlp_forward_pallas.1} parent=1 // pred_region
      _
    $region29: #{projection_mlp_forward_pallas.1} parent=1 // pred_fallthru
      _
    // Predicated region
    $region30: #{projection_mlp_forward_pallas.1} parent=1 // pred_check
      _
    $region31: #{projection_mlp_forward_pallas.1} parent=1 // pred_check_branch
      %55 = sbr.rel (0) target = $region33
    $region32: #{projection_mlp_forward_pallas.1} parent=1 // pred_region
      %57 = vsyncadd [#allocation7], 0
      %s58 = sshll.u32 %s7, 4
      %s59 = int_to_ptr.hbm [resolvable:$true] %s58
      %s60 = sshll.u32 [#allocation8], 4
      %s61 = int_to_ptr.vmem [resolvable:$true] %s60
      %66 = dma.hbm_to_vmem [thread:$0]  %s59, 1024, %s61, [#allocation7], 64, 64, 4
    $region33: #{projection_mlp_forward_pallas.1} parent=1 // pred_fallthru
      _
    // Predicated region
    $region34: #{projection_mlp_forward_pallas.1} parent=1 // pred_check
      _
    $region35: #{projection_mlp_forward_pallas.1} parent=1 // pred_check_branch
      %68 = sbr.rel (0) target = $region37
    $region36: #{projection_mlp_forward_pallas.1} parent=1 // pred_region
      _
    $region37: #{projection_mlp_forward_pallas.1} parent=1 // pred_fallthru
      _
    // Predicated region
    $region38: #{projection_mlp_forward_pallas.1} parent=1 // pred_check
      _
    $region39: #{projection_mlp_forward_pallas.1} parent=1 // pred_check_branch
      %70 = sbr.rel (0) target = $region41
    $region40: #{projection_mlp_forward_pallas.1} parent=1 // pred_region
      _
    $region41: #{projection_mlp_forward_pallas.1} parent=1 // pred_fallthru
      _
    // Predicated region
    $region42: #{projection_mlp_forward_pallas.1} parent=1 // pred_check
      _
    $region43: #{projection_mlp_forward_pallas.1} parent=1 // pred_check_branch
      %72 = sbr.rel (0) target = $region45
    $region44: #{projection_mlp_forward_pallas.1} parent=1 // pred_region
      %74 = dma.done [#allocation4], 256
    $region45: #{projection_mlp_forward_pallas.1} parent=1 // pred_fallthru
      _
    // Predicated region
    $region46: #{projection_mlp_forward_pallas.1} parent=1 // pred_check
      _
    $region47: #{projection_mlp_forward_pallas.1} parent=1 // pred_check_branch
      %76 = sbr.rel (0) target = $region49
    $region48: #{projection_mlp_forward_pallas.1} parent=1 // pred_region
      %78 = dma.done [#allocation7], 1024
    $region49: #{projection_mlp_forward_pallas.1} parent=1 // pred_fallthru
      _
    // Predicated region
    $region50: #{projection_mlp_forward_pallas.1} parent=1 // pred_check
      _
    $region51: #{projection_mlp_forward_pallas.1} parent=1 // pred_check_branch
      %80 = sbr.rel (0) target = $region53
    $region52: #{projection_mlp_forward_pallas.1} parent=1 // pred_region
      %82 = dma.done [#allocation7], 1024
    $region53: #{projection_mlp_forward_pallas.1} parent=1 // pred_fallthru
      _
    %p84 = scmp.eq.s32.totalorder 0, 0
    // Predicated region
    $region54: #{projection_mlp_forward_pallas.1} parent=1 // pred_check
      %p85 = pneg %p84
    $region55: #{projection_mlp_forward_pallas.1} parent=1 // pred_check_branch
      %87 = sbr.rel (%p85) target = $region57
    $region56: #{projection_mlp_forward_pallas.1} parent=1 // pred_region
      %v88 = vld [vmem:[%s0] sm:$0xf]
      %v89 = vld [vmem:[#allocation3] sm:$0xf]
      %v90 = vld [vmem:[#allocation3 + $0x4] sm:$0xf]
      %v91 = vld [vmem:[#allocation3 + $0x8] sm:$0xf]
      %v92 = vld [vmem:[#allocation3 + $0xc] sm:$0xf]
      %v97 = vunpack.c.l.b16 %v89
      %v98 = vunpack.c.l.b16 %v90
      %v99 = vunpack.c.l.b16 %v91
      %v100 = vunpack.c.l.b16 %v92
      %v101 = vpack.c.b16 %v98, %v97
      %v102 = vpack.c.b16 %v100, %v99
      %vm105 = vcmask 261120
      %v107 = vsel %vm105, %v88, 0
      %109 = vmatpush.bf16.msra.mxu0 0
      %110 = vmatpush.bf16.msra.mxu0 0
      %111 = vmatpush.bf16.msra.mxu0 0
      %112 = vmatpush.bf16.msra.mxu0 0
      %113 = vmatpush.bf16.msra.mxu0 0
      %114 = vmatpush.bf16.msra.mxu0 0
      %115 = vmatpush.bf16.msra.mxu0 %v102
      %116 = vmatpush.bf16.msra.mxu0 %v101
      %117 = vmatmul.bf16.gmra.mxu0 %v107
      %v118 = vpop.f32.mrf.mxu0
      %v119 = vadd.f32 0.0, %v118
      %v120 = vpop.f32.mrf.mxu0
      %121 = vdwg.mxu0
      %v122 = vld [vmem:[%s2] sm:$0x1]
      %v123 = vld [vmem:[%s3] sm:$0x1]
      %v124 = vrot.slane %v119, 4
      %v125 = vadd.f32 %v119, %v124
      %v126 = vrot.slane %v125, 2
      %v127 = vadd.f32 %v125, %v126
      %v128 = vrot.slane %v127, 1
      %v129 = vadd.f32 %v127, %v128
      %v130 = vmul.f32 %v129, 0.125
      %v131 = vmul.f32 %v119, %v119
      %v132 = vrot.slane %v131, 4
      %v133 = vadd.f32 %v131, %v132
      %v134 = vrot.slane %v133, 2
      %v135 = vadd.f32 %v133, %v134
      %v136 = vrot.slane %v135, 1
      %v137 = vadd.f32 %v135, %v136
      %v138 = vmul.f32 %v137, 0.125
      %v139 = vmul.f32 %v130, %v130
      %v140 = vsub.f32 %v138, %v139
      %v141 = vsub.f32 %v119, %v130
      %v142 = vadd.f32 %v140, 1e-05
      %v143 = vrsqrt.pop %v142
      %v144 = vmul.f32 %v143, %v142
      %v145 = vmul.f32 %v144, %v143
      %v146 = vmul.f32 0.5, %v145
      %v147 = vsub.f32 1.5, %v146
      %v148 = vmul.f32 %v143, %v147
      %vm149 = vweird.f32 %v142
      %vm150 = vweird.f32 %v143
      %vm151 = vmor %vm149, %vm150
      %v152 = vsel %vm151, %v143, %v148
      %v153 = vmul.f32 %v141, %v152
      %v155 = vperm.slane %v122, 0
      %v157 = vmul.f32 %v153, %v155
      %v159 = vperm.slane %v123, 0
      %v161 = vadd.f32 %v157, %v159
      %v162 = vmax.f32 %v161, 0.0
      %v163 = vpack.c.bf16 %v162, %v162
      %v164 = vld [vmem:[#allocation6] sm:$0xf]
      %v165 = vld [vmem:[#allocation6 + $0x4] sm:$0xf]
      %v166 = vld [vmem:[#allocation6 + $0x8] sm:$0xf]
      %v167 = vld [vmem:[#allocation6 + $0xc] sm:$0xf]
      %v168 = vld [vmem:[#allocation6 + $0x10] sm:$0xf]
      %v169 = vld [vmem:[#allocation6 + $0x14] sm:$0xf]
      %v170 = vld [vmem:[#allocation6 + $0x18] sm:$0xf]
      %v171 = vld [vmem:[#allocation6 + $0x1c] sm:$0xf]
      %v172 = vld [vmem:[#allocation6 + $0x20] sm:$0xf]
      %v173 = vld [vmem:[#allocation6 + $0x24] sm:$0xf]
      %v174 = vld [vmem:[#allocation6 + $0x28] sm:$0xf]
      %v175 = vld [vmem:[#allocation6 + $0x2c] sm:$0xf]
      %v176 = vld [vmem:[#allocation6 + $0x30] sm:$0xf]
      %v177 = vld [vmem:[#allocation6 + $0x34] sm:$0xf]
      %v178 = vld [vmem:[#allocation6 + $0x38] sm:$0xf]
      %v179 = vld [vmem:[#allocation6 + $0x3c] sm:$0xf]
      %v196 = vunpack.c.l.b16 %v164
      %v197 = vunpack.c.l.b16 %v165
      %v198 = vunpack.c.l.b16 %v166
      %v199 = vunpack.c.l.b16 %v167
      %v200 = vunpack.c.l.b16 %v168
      %v201 = vunpack.c.l.b16 %v169
      %v202 = vunpack.c.l.b16 %v170
      %v203 = vunpack.c.l.b16 %v171
      %v204 = vunpack.c.l.b16 %v172
      %v205 = vunpack.c.l.b16 %v173
      %v206 = vunpack.c.l.b16 %v174
      %v207 = vunpack.c.l.b16 %v175
      %v208 = vunpack.c.l.b16 %v176
      %v209 = vunpack.c.l.b16 %v177
      %v210 = vunpack.c.l.b16 %v178
      %v211 = vunpack.c.l.b16 %v179
      %v212 = vpack.c.b16 %v197, %v196
      %v213 = vpack.c.b16 %v199, %v198
      %v214 = vpack.c.b16 %v201, %v200
      %v215 = vpack.c.b16 %v203, %v202
      %v216 = vpack.c.b16 %v205, %v204
      %v217 = vpack.c.b16 %v207, %v206
      %v218 = vpack.c.b16 %v209, %v208
      %v219 = vpack.c.b16 %v211, %v210
      %228 = vmatpush.bf16.msra.mxu0 %v219
      %229 = vmatpush.bf16.msra.mxu0 %v218
      %230 = vmatpush.bf16.msra.mxu0 %v217
      %231 = vmatpush.bf16.msra.mxu0 %v216
      %232 = vmatpush.bf16.msra.mxu0 %v215
      %233 = vmatpush.bf16.msra.mxu0 %v214
      %234 = vmatpush.bf16.msra.mxu0 %v213
      %235 = vmatpush.bf16.msra.mxu0 %v212
      %236 = vmatmul.bf16.gmra.mxu0 %v163
      %v237 = vpop.f32.mrf.mxu0
      %v238 = vadd.f32 0.0, %v237
      %v239 = vpop.f32.mrf.mxu0
      %240 = vdwg.mxu0
      %v241 = vld [vmem:[%s5] sm:$0x1]
      %v242 = vld [vmem:[%s6] sm:$0x1]
      %v243 = vrot.slane %v238, 4
      %v244 = vadd.f32 %v238, %v243
      %v245 = vrot.slane %v244, 2
      %v246 = vadd.f32 %v244, %v245
      %v247 = vrot.slane %v246, 1
      %v248 = vadd.f32 %v246, %v247
      %v249 = vmul.f32 %v248, 0.125
      %v250 = vmul.f32 %v238, %v238
      %v251 = vrot.slane %v250, 4
      %v252 = vadd.f32 %v250, %v251
      %v253 = vrot.slane %v252, 2
      %v254 = vadd.f32 %v252, %v253
      %v255 = vrot.slane %v254, 1
      %v256 = vadd.f32 %v254, %v255
      %v257 = vmul.f32 %v256, 0.125
      %v258 = vmul.f32 %v249, %v249
      %v259 = vsub.f32 %v257, %v258
      %v260 = vsub.f32 %v238, %v249
      %v261 = vadd.f32 %v259, 1e-05
      %v262 = vrsqrt.pop %v261
      %v263 = vmul.f32 %v262, %v261
      %v264 = vmul.f32 %v263, %v262
      %v265 = vmul.f32 0.5, %v264
      %v266 = vsub.f32 1.5, %v265
      %v267 = vmul.f32 %v262, %v266
      %vm268 = vweird.f32 %v261
      %vm269 = vweird.f32 %v262
      %vm270 = vmor %vm268, %vm269
      %v271 = vsel %vm270, %v262, %v267
      %v272 = vmul.f32 %v260, %v271
      %v274 = vperm.slane %v241, 0
      %v276 = vmul.f32 %v272, %v274
      %v278 = vperm.slane %v242, 0
      %v280 = vadd.f32 %v276, %v278
      %v281 = vmax.f32 %v280, 0.0
      %v282 = vpack.c.bf16 %v281, %v281
      %283 = vst [vmem:[#allocation2] sm:$0xf] %v282
    $region57: #{projection_mlp_forward_pallas.1} parent=1 // pred_fallthru
      _
    %v284 = vld [vmem:[#allocation2] sm:$0xf]
    %v285 = vld [vmem:[#allocation8] sm:$0xf]
    %v286 = vld [vmem:[#allocation8 + $0x4] sm:$0xf]
    %v287 = vld [vmem:[#allocation8 + $0x8] sm:$0xf]
    %v288 = vld [vmem:[#allocation8 + $0xc] sm:$0xf]
    %v289 = vld [vmem:[#allocation8 + $0x10] sm:$0xf]
    %v290 = vld [vmem:[#allocation8 + $0x14] sm:$0xf]
    %v291 = vld [vmem:[#allocation8 + $0x18] sm:$0xf]
    %v292 = vld [vmem:[#allocation8 + $0x1c] sm:$0xf]
    %v293 = vld [vmem:[#allocation8 + $0x20] sm:$0xf]
    %v294 = vld [vmem:[#allocation8 + $0x24] sm:$0xf]
    %v295 = vld [vmem:[#allocation8 + $0x28] sm:$0xf]
    %v296 = vld [vmem:[#allocation8 + $0x2c] sm:$0xf]
    %v297 = vld [vmem:[#allocation8 + $0x30] sm:$0xf]
    %v298 = vld [vmem:[#allocation8 + $0x34] sm:$0xf]
    %v299 = vld [vmem:[#allocation8 + $0x38] sm:$0xf]
    %v300 = vld [vmem:[#allocation8 + $0x3c] sm:$0xf]
    %v317 = vunpack.c.l.b16 %v285
    %v318 = vunpack.c.l.b16 %v286
    %v319 = vunpack.c.l.b16 %v287
    %v320 = vunpack.c.l.b16 %v288
    %v321 = vunpack.c.l.b16 %v289
    %v322 = vunpack.c.l.b16 %v290
    %v323 = vunpack.c.l.b16 %v291
    %v324 = vunpack.c.l.b16 %v292
    %v325 = vunpack.c.l.b16 %v293
    %v326 = vunpack.c.l.b16 %v294
    %v327 = vunpack.c.l.b16 %v295
    %v328 = vunpack.c.l.b16 %v296
    %v329 = vunpack.c.l.b16 %v297
    %v330 = vunpack.c.l.b16 %v298
    %v331 = vunpack.c.l.b16 %v299
    %v332 = vunpack.c.l.b16 %v300
    %v333 = vpack.c.b16 %v318, %v317
    %v334 = vpack.c.b16 %v320, %v319
    %v335 = vpack.c.b16 %v322, %v321
    %v336 = vpack.c.b16 %v324, %v323
    %v337 = vpack.c.b16 %v326, %v325
    %v338 = vpack.c.b16 %v328, %v327
    %v339 = vpack.c.b16 %v330, %v329
    %v340 = vpack.c.b16 %v332, %v331
    %349 = vmatpush.bf16.msra.mxu0 %v340
    %350 = vmatpush.bf16.msra.mxu0 %v339
    %351 = vmatpush.bf16.msra.mxu0 %v338
    %352 = vmatpush.bf16.msra.mxu0 %v337
    %353 = vmatpush.bf16.msra.mxu0 %v336
    %354 = vmatpush.bf16.msra.mxu0 %v335
    %355 = vmatpush.bf16.msra.mxu0 %v334
    %356 = vmatpush.bf16.msra.mxu0 %v333
    %357 = vmatmul.bf16.gmra.mxu0 %v284
    %v358 = vpop.f32.mrf.mxu0
    %v359 = vadd.f32 0.0, %v358
    %v360 = vpop.f32.mrf.mxu0
    %361 = vdwg.mxu0
    %v362 = vld [vmem:[%s8] sm:$0x1]
    %v363 = vld [vmem:[%s9] sm:$0x1]
    %v364 = vrot.slane %v359, 4
    %v365 = vadd.f32 %v359, %v364
    %v366 = vrot.slane %v365, 2
    %v367 = vadd.f32 %v365, %v366
    %v368 = vrot.slane %v367, 1
    %v369 = vadd.f32 %v367, %v368
    %v370 = vmul.f32 %v369, 0.125
    %v371 = vmul.f32 %v359, %v359
    %v372 = vrot.slane %v371, 4
    %v373 = vadd.f32 %v371, %v372
    %v374 = vrot.slane %v373, 2
    %v375 = vadd.f32 %v373, %v374
    %v376 = vrot.slane %v375, 1
    %v377 = vadd.f32 %v375, %v376
    %v378 = vmul.f32 %v377, 0.125
    %v379 = vmul.f32 %v370, %v370
    %v380 = vsub.f32 %v378, %v379
    %v381 = vsub.f32 %v359, %v370
    %v382 = vadd.f32 %v380, 1e-05
    %v383 = vrsqrt.pop %v382
    %v384 = vmul.f32 %v383, %v382
    %v385 = vmul.f32 %v384, %v383
    %v386 = vmul.f32 0.5, %v385
    %v387 = vsub.f32 1.5, %v386
    %v388 = vmul.f32 %v383, %v387
    %vm389 = vweird.f32 %v382
    %vm390 = vweird.f32 %v383
    %vm391 = vmor %vm389, %vm390
    %v392 = vsel %vm391, %v383, %v388
    %v393 = vmul.f32 %v381, %v392
    %v395 = vperm.slane %v362, 0
    %v397 = vmul.f32 %v393, %v395
    %v399 = vperm.slane %v363, 0
    %v401 = vadd.f32 %v397, %v399
    %402 = vst [vmem:[#allocation9] sm:$0xff] %v401
    // Predicated region
    $region58: #{projection_mlp_forward_pallas.1} parent=1 // pred_check
      _
    $region59: #{projection_mlp_forward_pallas.1} parent=1 // pred_check_branch
      %404 = sbr.rel (0) target = $region61
    $region60: #{projection_mlp_forward_pallas.1} parent=1 // pred_region
      %406 = vsyncadd [#allocation5], 0
      %s408 = sshll.u32 [#allocation9], 4
      %s409 = int_to_ptr.vmem [resolvable:$true] %s408
      %s410 = sshll.u32 %s10, 4
      %s411 = int_to_ptr.hbm [resolvable:$true] %s410
      %413 = dma.vmem_to_hbm [thread:$0]  %s409, 128, %s411, [#allocation5]
    $region61: #{projection_mlp_forward_pallas.1} parent=1 // pred_fallthru
      _
    // Predicated region
    $region62: #{projection_mlp_forward_pallas.1} parent=1 // pred_check
      _
    $region63: #{projection_mlp_forward_pallas.1} parent=1 // pred_check_branch
      %415 = sbr.rel (0) target = $region65
    $region64: #{projection_mlp_forward_pallas.1} parent=1 // pred_region
      %417 = dma.done [#allocation5], 128
    $region65: #{projection_mlp_forward_pallas.1} parent=1 // pred_fallthru
      _
    %418 = vsyncpa [#allocation4], 1
    %419 = vsyncpa [#allocation7], 1
    %420 = vsyncpa [#allocation5], 1

</llo_original>
